<compile_context>
chip_gen: v7x
topology: tpu7x:2x2x1
jax: 0.10.0
libtpu: 0.0.40
codegen_flags: <defaults>
</compile_context>

<pallas_src>
import functools

import jax
import jax.numpy as jnp
from jax.experimental import pallas as pl
from jax.experimental.pallas import tpu as pltpu

EPS = 1e-5


def _round_up(x, m):
    return (x + m - 1) // m * m


def _vmem_budget_bytes():
    """~75% of physical VMEM (48 MiB on v7x, 96 MiB on v5e/v6e); safe fallback."""
    try:
        info = pltpu.get_tpu_info()
        cap = int(getattr(info, "vmem_capacity_bytes", 0) or 0)
        if cap > 0:
            return (cap * 3) // 4
    except Exception:
        pass
    return 48 * 1024 * 1024  # under the 64 MiB of v7x, conservative elsewhere


def _choose_tile_hw(HW, cp, cop, pad_cols, vmem_budget):
    """Largest 128-multiple divisor of HW whose per-tile working set fits."""
    if HW % 128 != 0:
        return HW                       # single full-extent tile
    # Resident per image: bf16 x (double-buffered) + bf16 halo scratch.
    fixed = 2 * cp * HW * 2 + cp * pad_cols * 2
    # Per output column: f32 out (double-buffered) + bf16 per-kh rows/temps.
    per_col = 2 * cop * 4 + 4 * 3 * cp * 2
    avail = vmem_budget - fixed - (1 << 20)
    if avail <= per_col * 128:
        t_max = 128
    else:
        t_max = min(HW, (avail // per_col) // 128 * 128, 8192)
    best = 128
    cand = 256
    while cand <= t_max:
        if HW % cand == 0:
            best = cand
        cand += 128
    return best


# ---------------------------------------------------------------------------
# Pass 1: global BatchNorm statistics -> folded per-channel scale / shift.
# ---------------------------------------------------------------------------
def _bn_stats_kernel(x_ref, gamma_ref, beta_ref, ss_ref, *, count, eps):
    # x_ref:     (1, Cp, THW) bf16  (one spatial tile of one image, lane-dense)
    # gamma_ref: (Cp, 1)      f32
    # beta_ref:  (Cp, 1)      f32
    # ss_ref:    (Cp, 2)      f32  accumulator; finally col0=scale, col1=shift
    first = (pl.program_id(0) == 0) & (pl.program_id(1) == 0)
    last = ((pl.program_id(0) == pl.num_programs(0) - 1) &
            (pl.program_id(1) == pl.num_programs(1) - 1))

    @pl.when(first)
    def _init():
        ss_ref[...] = jnp.zeros_like(ss_ref)

    x = x_ref[0].astype(jnp.float32)                        # (Cp, THW)
    ss_ref[:, 0:1] += jnp.sum(x, axis=1, keepdims=True)
    ss_ref[:, 1:2] += jnp.sum(x * x, axis=1, keepdims=True)

    @pl.when(last)
    def _finalize():
        inv_n = 1.0 / count
        mean = ss_ref[:, 0:1] * inv_n                       # (Cp, 1)
        var = jnp.maximum(ss_ref[:, 1:2] * inv_n - mean * mean, 0.0)
        scale = gamma_ref[...] * jax.lax.rsqrt(var + eps)   # EUP rsqrt
        shift = beta_ref[...] - mean * scale
        ss_ref[:, 0:1] = scale
        ss_ref[:, 1:2] = shift


# ---------------------------------------------------------------------------
# Pass 2: BN -> ReLU -> bf16 halo staging (once per image) -> per-kh
#         accumulating MXU matmuls per spatial tile.
# ---------------------------------------------------------------------------
def _bn_relu_conv_kernel(x_ref, w_ref, ss_ref, out_ref, pad_ref,
                         *, H, W, dilation, ksize, lead, tile_hw):
    # x_ref:   (1, Cp, H*W)           bf16  resident per image (index_map ignores t)
    # w_ref:   (ksize, Cop, ksize*Cp) bf16  w[kh, o, kw*Cp + c]
    # ss_ref:  (Cp, 2)                f32   col0 = scale, col1 = shift (folded BN)
    # out_ref: (1, Cop, TILE_HW)      f32   lane-dense output tile
    # pad_ref: (Cp, lead+H*W+trail)   bf16  flat halo scratch (lead % 128 == 0)
    cp = x_ref.shape[1]
    hw = H * W
    d = dilation
    half = ksize // 2
    t = pl.program_id(1)

    # ---- stage the image once per image (first spatial tile) ----
    @pl.when(t == 0)
    def _stage():
        trail = pad_ref.shape[1] - lead - hw
        pad_ref[:, 0:lead] = jnp.zeros((cp, lead), dtype=pad_ref.dtype)
        pad_ref[:, lead + hw:lead + hw + trail] = jnp.zeros(
            (cp, trail), dtype=pad_ref.dtype)
        scale = ss_ref[:, 0:1]
        shift = ss_ref[:, 1:2]
        y = jnp.maximum(x_ref[0].astype(jnp.float32) * scale + shift, 0.0)
        pad_ref[:, lead:lead + hw] = y.astype(pad_ref.dtype)   # lane-aligned store

    # ---- current spatial tile ----
    base = t * tile_hw
    if tile_hw % 128 == 0:
        base = pl.multiple_of(base, 128)

    # column index of each lane of this tile (for W-boundary masks)
    w_idx = (jax.lax.broadcasted_iota(jnp.int32, (1, tile_hw), 1)
             + t * tile_hw) % W

    # per-kh accumulating matmuls: (Cop, 3*Cp) @ (3*Cp, TILE_HW)
    for kh in range(ksize):
        dh = (kh - half) * d
        row_taps = []
        for kw in range(ksize):
            dw = (kw - half) * d
            off = dh * W + dw
            tap = pad_ref[:, pl.ds(base + (lead + off), tile_hw)]  # (Cp, THW) bf16
            if dw != 0:
                keep = (w_idx >= -dw) & (w_idx < W - dw)
                tap = jnp.where(keep, tap, jnp.zeros_like(tap))
            row_taps.append(tap)
        row = jnp.concatenate(row_taps, axis=0)                # (ksize*Cp, THW) bf16
        contrib = jnp.dot(w_ref[kh], row, preferred_element_type=jnp.float32)
        if kh == 0:
            out_ref[0] = contrib
        else:
            out_ref[0] += contrib


# ---------------------------------------------------------------------------
# Public wrapper (PyTorch-style NCHW in / NCHW out).
# ---------------------------------------------------------------------------
def convolutional_block(x_nchw, weight_oihw, gamma, beta, *, dilation,
                        ksize=3, eps=EPS):
    """BatchNorm2d (train stats) -> ReLU -> ZeroPad2d(d) -> dilated Conv2d."""
    N, C_in, H, W = x_nchw.shape
    C_out = weight_oihw.shape[0]
    HW = H * W
    k2 = ksize * ksize
    half = ksize // 2
    assert ksize % 2 == 1, "odd kernel size expected"
    # Guard for the flat-halo + column-mask aliasing argument.
    assert dilation >= 1 and half * dilation < min(H, W), \
        "flat-halo trick requires half*dilation < min(H, W)"

    cp = _round_up(C_in, 16)    # bf16 sublane packing
    cop = _round_up(C_out, 8)   # f32 output sublanes

    halo = half * dilation * (W + 1)
    lead = _round_up(halo, 128)                      # lane-aligned interior
    trail = _round_up(HW + halo, 128) - HW           # >= halo
    pad_cols = lead + HW + trail

    vmem_budget = _vmem_budget_bytes()
    tile_hw = _choose_tile_hw(HW, cp, cop, pad_cols, vmem_budget)
    num_tiles = HW // tile_hw

    # --- layout glue: tiny pads + free reshapes (heavy work stays in-kernel) ---
    x = jnp.pad(x_nchw.astype(jnp.float32),
                ((0, 0), (0, cp - C_in), (0, 0), (0, 0)))
    x_flat = x.reshape(N, cp, HW).astype(jnp.bfloat16)        # bf16 HBM staging

    w = jnp.transpose(weight_oihw.astype(jnp.float32), (2, 0, 3, 1))  # (kh,Co,kw,Ci)
    w = jnp.pad(w, ((0, 0), (0, cop - C_out), (0, 0), (0, cp - C_in)))
    w3 = w.reshape(ksize, cop, ksize * cp).astype(jnp.bfloat16)

    gamma_c = jnp.pad(gamma.astype(jnp.float32), (0, cp - C_in)).reshape(cp, 1)
    beta_c = jnp.pad(beta.astype(jnp.float32), (0, cp - C_in)).reshape(cp, 1)

    # --- pass 1: global BN statistics (reduction over batch and spatial tiles) ---
    stats = pl.pallas_call(
        functools.partial(_bn_stats_kernel, count=float(N * HW), eps=eps),
        out_shape=jax.ShapeDtypeStruct((cp, 2), jnp.float32),
        grid=(N, num_tiles),
        in_specs=[
            pl.BlockSpec((1, cp, tile_hw), lambda n, t: (n, 0, t)),
            pl.BlockSpec((cp, 1), lambda n, t: (0, 0)),
            pl.BlockSpec((cp, 1), lambda n, t: (0, 0)),
        ],
        out_specs=pl.BlockSpec((cp, 2), lambda n, t: (0, 0)),
        compiler_params=pltpu.CompilerParams(
            dimension_semantics=("arbitrary", "arbitrary"),
            vmem_limit_bytes=vmem_budget),
    )(x_flat, gamma_c, beta_c)

    # --- pass 2: fused BN -> ReLU -> halo staging -> per-kh MXU matmuls ---
    out_flat = pl.pallas_call(
        functools.partial(_bn_relu_conv_kernel, H=H, W=W, dilation=dilation,
                          ksize=ksize, lead=lead, tile_hw=tile_hw),
        out_shape=jax.ShapeDtypeStruct((N, cop, HW), jnp.float32),
        grid=(N, num_tiles),
        in_specs=[
            pl.BlockSpec((1, cp, HW), lambda n, t: (n, 0, 0)),      # resident/image
            pl.BlockSpec((ksize, cop, ksize * cp), lambda n, t: (0, 0, 0)),
            pl.BlockSpec((cp, 2), lambda n, t: (0, 0)),
        ],
        out_specs=pl.BlockSpec((1, cop, tile_hw), lambda n, t: (n, 0, t)),
        scratch_shapes=[pltpu.VMEM((cp, pad_cols), jnp.bfloat16)],
        compiler_params=pltpu.CompilerParams(
            dimension_semantics=("parallel", "arbitrary"),
            vmem_limit_bytes=vmem_budget),
    )(x_flat, w3, stats)

    # Output already channel-major: (N, Cop, H*W) -> NCHW for free.
    return out_flat[:, :C_out, :].reshape(N, C_out, H, W)


# ---------------------------------------------------------------------------
# Pure-JAX reference of the same forward pass.
# ---------------------------------------------------------------------------
def _reference(x, w, gamma, beta, dilation, eps=EPS, match_kernel=True):
    if match_kernel:  # mirror the kernel's bf16 input staging
        x = x.astype(jnp.bfloat16).astype(jnp.float32)
    mean = x.mean(axis=(0, 2, 3), keepdims=True)
    var = jnp.maximum((x * x).mean(axis=(0, 2, 3), keepdims=True) - mean * mean, 0.0)
    scale = gamma.reshape(1, -1, 1, 1) * jax.lax.rsqrt(var + eps)
    shift = beta.reshape(1, -1, 1, 1) - mean * scale
    y = jnp.maximum(x * scale + shift, 0.0)
    y = jnp.pad(y, ((0, 0), (0, 0), (dilation, dilation), (dilation, dilation)))
    if match_kernel:  # mirror bf16 operands / f32 accumulation on the MXU
        y = y.astype(jnp.bfloat16)
        w = w.astype(jnp.bfloat16)
    return jax.lax.conv_general_dilated(
        y, w, window_strides=(1, 1), padding="VALID",
        rhs_dilation=(dilation, dilation),
        dimension_numbers=("NCHW", "OIHW", "NCHW"),
        preferred_element_type=jnp.float32)


if __name__ == "__main__":
    N, C_IN, C_OUT, H, W = 2, 4, 8, 16, 16
    DILATION, KSIZE = 2, 3

    key = jax.random.PRNGKey(0)
    kx, kw, kg, kb = jax.random.split(key, 4)

    x = jax.random.normal(kx, (N, C_IN, H, W), dtype=jnp.float32)
    # Synthetic parameters (shapes match nn.Conv2d / nn.BatchNorm2d).
    weight = 0.1 * jax.random.normal(kw, (C_OUT, C_IN, KSIZE, KSIZE),
                                     dtype=jnp.float32)
    gamma = 1.0 + 0.1 * jax.random.normal(kg, (C_IN,), dtype=jnp.float32)
    beta = 0.1 * jax.random.normal(kb, (C_IN,), dtype=jnp.float32)

    out = convolutional_block(x, weight, gamma, beta,
                              dilation=DILATION, ksize=KSIZE)
    out = jax.block_until_ready(out)
    assert out.shape == (N, C_OUT, H, W)

    # Tight check vs a reference with the same bf16 staging / bf16 MXU operands,
    # looser check vs the pure-f32 forward pass.
    ref_match = _reference(x, weight, gamma, beta, DILATION, match_kernel=True)
    ref_f32 = _reference(x, weight, gamma, beta, DILATION, match_kernel=False)
    err_m = float(jnp.max(jnp.abs(out - ref_match)))
    err_f = float(jnp.max(jnp.abs(out - ref_f32)))
    assert err_m < 2e-2, f"matched-ref mismatch: {err_m}"
    assert err_f < 6e-2, f"f32-ref mismatch: {err_f}"

    print("KERNEL_OK")
</pallas_src>

<mosaic_0001>
module attributes {stable_mosaic.version = 11 : i64} {
  func.func @_bn_stats_kernel(%arg0: i32, %arg1: i32, %arg2: memref<1x16x256xbf16, #tpu.memory_space<vmem>>, %arg3: memref<16x1xf32, #tpu.memory_space<vmem>>, %arg4: memref<16x1xf32, #tpu.memory_space<vmem>>, %arg5: memref<16x2xf32, #tpu.memory_space<vmem>>) attributes {dimension_semantics = [#tpu.dimension_semantics<arbitrary>, #tpu.dimension_semantics<arbitrary>], iteration_bounds = array<i64: 2, 1>, scalar_prefetch = 0 : i64, scratch_operands = 0 : i64, tpu.core_type = #tpu.core_type<tc>, window_params = [{transform_indices = @transform_0, window_bounds = array<i64: 1, 16, 256>}, {pipeline_mode = #tpu.pipeline_mode<synchronous>, transform_indices = @transform_1, window_bounds = array<i64: 16, 1>}, {pipeline_mode = #tpu.pipeline_mode<synchronous>, transform_indices = @transform_2, window_bounds = array<i64: 16, 1>}, {pipeline_mode = #tpu.pipeline_mode<synchronous>, transform_indices = @transform_3, window_bounds = array<i64: 16, 2>}]} {
    %c0_i32 = arith.constant 0 : i32
    %0 = arith.cmpi eq, %arg0, %c0_i32 : i32
    %c0_i32_0 = arith.constant 0 : i32
    %1 = arith.cmpi eq, %arg1, %c0_i32_0 : i32
    %2 = arith.andi %0, %1 : i1
    %c1_i32 = arith.constant 1 : i32
    %3 = arith.cmpi eq, %arg0, %c1_i32 : i32
    %c0_i32_1 = arith.constant 0 : i32
    %4 = arith.cmpi eq, %arg1, %c0_i32_1 : i32
    %5 = arith.andi %3, %4 : i1
    %6 = arith.extui %2 : i1 to i32
    %c0_i32_2 = arith.constant 0 : i32
    %7 = arith.cmpi ne, %6, %c0_i32_2 : i32
    scf.if %7 {
      %cst_14 = arith.constant 0.000000e+00 : f32
      %24 = vector.broadcast %cst_14 : f32 to vector<16x2xf32>
      %c0_15 = arith.constant 0 : index
      %c0_16 = arith.constant 0 : index
      %25 = vector.load %arg5[%c0_15, %c0_16] : memref<16x2xf32, #tpu.memory_space<vmem>>, vector<16x2xf32>
      tpu.vector_store %arg5[%c0_15, %c0_16], %24 {strides = array<i32>} : memref<16x2xf32, #tpu.memory_space<vmem>>, vector<16x2xf32>,
    } else {
    }
    %c0 = arith.constant 0 : index
    %c0_3 = arith.constant 0 : index
    %c0_4 = arith.constant 0 : index
    %8 = vector.load %arg2[%c0, %c0_3, %c0_4] : memref<1x16x256xbf16, #tpu.memory_space<vmem>>, vector<1x16x256xbf16>
    %9 = vector.shape_cast %8 : vector<1x16x256xbf16> to vector<16x256xbf16>
    %10 = arith.extf %9 : vector<16x256xbf16> to vector<16x256xf32>
    %c0_5 = arith.constant 0 : index
    %c0_6 = arith.constant 0 : index
    %11 = vector.load %arg5[%c0_5, %c0_6] : memref<16x2xf32, #tpu.memory_space<vmem>>, vector<16x1xf32>
    %cst = arith.constant dense<0.000000e+00> : vector<16xf32>
    %12 = vector.multi_reduction <add>, %10, %cst [1] : vector<16x256xf32> to vector<16xf32>
    %13 = vector.shape_cast %12 : vector<16xf32> to vector<16x1xf32>
    %14 = arith.addf %11, %13 : vector<16x1xf32>
    %c0_7 = arith.constant 0 : index
    %c0_8 = arith.constant 0 : index
    %15 = vector.load %arg5[%c0_7, %c0_8] : memref<16x2xf32, #tpu.memory_space<vmem>>, vector<16x1xf32>
    tpu.vector_store %arg5[%c0_7, %c0_8], %14 {strides = array<i32>} : memref<16x2xf32, #tpu.memory_space<vmem>>, vector<16x1xf32>,
    %c0_9 = arith.constant 0 : index
    %c1 = arith.constant 1 : index
    %16 = vector.load %arg5[%c0_9, %c1] : memref<16x2xf32, #tpu.memory_space<vmem>>, vector<16x1xf32>
    %17 = arith.mulf %10, %10 : vector<16x256xf32>
    %cst_10 = arith.constant dense<0.000000e+00> : vector<16xf32>
    %18 = vector.multi_reduction <add>, %17, %cst_10 [1] : vector<16x256xf32> to vector<16xf32>
    %19 = vector.shape_cast %18 : vector<16xf32> to vector<16x1xf32>
    %20 = arith.addf %16, %19 : vector<16x1xf32>
    %c0_11 = arith.constant 0 : index
    %c1_12 = arith.constant 1 : index
    %21 = vector.load %arg5[%c0_11, %c1_12] : memref<16x2xf32, #tpu.memory_space<vmem>>, vector<16x1xf32>
    tpu.vector_store %arg5[%c0_11, %c1_12], %20 {strides = array<i32>} : memref<16x2xf32, #tpu.memory_space<vmem>>, vector<16x1xf32>,
    %22 = arith.extui %5 : i1 to i32
    %c0_i32_13 = arith.constant 0 : i32
    %23 = arith.cmpi ne, %22, %c0_i32_13 : i32
    scf.if %23 {
      %c0_14 = arith.constant 0 : index
      %c0_15 = arith.constant 0 : index
      %24 = vector.load %arg5[%c0_14, %c0_15] : memref<16x2xf32, #tpu.memory_space<vmem>>, vector<16x1xf32>
      %cst_16 = arith.constant 0.001953125 : f32
      %25 = vector.broadcast %cst_16 : f32 to vector<16x1xf32>
      %26 = arith.mulf %24, %25 : vector<16x1xf32>
      %c0_17 = arith.constant 0 : index
      %c1_18 = arith.constant 1 : index
      %27 = vector.load %arg5[%c0_17, %c1_18] : memref<16x2xf32, #tpu.memory_space<vmem>>, vector<16x1xf32>
      %cst_19 = arith.constant 0.001953125 : f32
      %28 = vector.broadcast %cst_19 : f32 to vector<16x1xf32>
      %29 = arith.mulf %27, %28 : vector<16x1xf32>
      %30 = arith.mulf %26, %26 : vector<16x1xf32>
      %31 = arith.subf %29, %30 : vector<16x1xf32>
      %cst_20 = arith.constant 0.000000e+00 : f32
      %32 = vector.broadcast %cst_20 : f32 to vector<16x1xf32>
      %33 = arith.maximumf %31, %32 : vector<16x1xf32>
      %c0_21 = arith.constant 0 : index
      %c0_22 = arith.constant 0 : index
      %34 = vector.load %arg3[%c0_21, %c0_22] : memref<16x1xf32, #tpu.memory_space<vmem>>, vector<16x1xf32>
      %cst_23 = arith.constant 9.99999974E-6 : f32
      %35 = vector.broadcast %cst_23 : f32 to vector<16x1xf32>
      %36 = arith.addf %33, %35 : vector<16x1xf32>
      %37 = math.rsqrt %36 : vector<16x1xf32>
      %38 = arith.mulf %34, %37 : vector<16x1xf32>
      %c0_24 = arith.constant 0 : index
      %c0_25 = arith.constant 0 : index
      %39 = vector.load %arg4[%c0_24, %c0_25] : memref<16x1xf32, #tpu.memory_space<vmem>>, vector<16x1xf32>
      %40 = arith.mulf %26, %38 : vector<16x1xf32>
      %41 = arith.subf %39, %40 : vector<16x1xf32>
      %c0_26 = arith.constant 0 : index
      %c0_27 = arith.constant 0 : index
      %42 = vector.load %arg5[%c0_26, %c0_27] : memref<16x2xf32, #tpu.memory_space<vmem>>, vector<16x1xf32>
      tpu.vector_store %arg5[%c0_26, %c0_27], %38 {strides = array<i32>} : memref<16x2xf32, #tpu.memory_space<vmem>>, vector<16x1xf32>,
      %c0_28 = arith.constant 0 : index
      %c1_29 = arith.constant 1 : index
      %43 = vector.load %arg5[%c0_28, %c1_29] : memref<16x2xf32, #tpu.memory_space<vmem>>, vector<16x1xf32>
      tpu.vector_store %arg5[%c0_28, %c1_29], %41 {strides = array<i32>} : memref<16x2xf32, #tpu.memory_space<vmem>>, vector<16x1xf32>,
    } else {
    }
    return
  }
  func.func @transform_0(%arg0: i32, %arg1: i32) -> (i32, i32, i32) {
    %c0_i32 = arith.constant 0 : i32
    %c0_i32_0 = arith.constant 0 : i32
    return %arg0, %c0_i32, %arg1 : i32, i32, i32
  }
  func.func @transform_1(%arg0: i32, %arg1: i32) -> (i32, i32) {
    %c0_i32 = arith.constant 0 : i32
    %c0_i32_0 = arith.constant 0 : i32
    %c0_i32_1 = arith.constant 0 : i32
    return %c0_i32, %c0_i32_0 : i32, i32
  }
  func.func @transform_2(%arg0: i32, %arg1: i32) -> (i32, i32) {
    %c0_i32 = arith.constant 0 : i32
    %c0_i32_0 = arith.constant 0 : i32
    %c0_i32_1 = arith.constant 0 : i32
    return %c0_i32, %c0_i32_0 : i32, i32
  }
  func.func @transform_3(%arg0: i32, %arg1: i32) -> (i32, i32) {
    %c0_i32 = arith.constant 0 : i32
    %c0_i32_0 = arith.constant 0 : i32
    %c0_i32_1 = arith.constant 0 : i32
    return %c0_i32, %c0_i32_0 : i32, i32
  }
}

</mosaic_0001>

<llo_original>
// kernel: tpu_custom_call.1
$region0: #{tpu_custom_call.1}
  #allocation0 [shape = 'u32[]', space=smem, size = 0x4, offset = 0x4, fixed_abs, tag = 'smem constant byte address 0x4 - core index']
  #allocation1 [shape = 'u32[144,128]{1,0:T(1,128)}', space=vmem, size = 0x12000, scoped, tag = 'internal scratch']
  %s0 = inlined_call_operand.vmem [shape: bf16[2,16,256], index: 0, kind: input, shape index: {}]
  %s1 = inlined_call_operand.vmem [shape: f32[16,1], index: 1, kind: input, shape index: {}]
  %s2 = inlined_call_operand.vmem [shape: f32[16,1], index: 2, kind: input, shape index: {}]
  %s3 = inlined_call_operand.vmem [shape: f32[16,2], index: 3, kind: output, shape index: {}]
  %s4 = sld [smem:[#allocation0]]
  $region53: #{tpu_custom_call.1} parent=0
    _
  %s6 = ssub.s32 1, %s4
  %s7 = scalar_select 0, %s6, %s4
  loop: start=0, step=1, limit=4
  $region2: #{tpu_custom_call.1} parent=0 // loop_pre_header
    _
  $region3: #{tpu_custom_call.1} parent=0 // loop_header
    %s9 = sphi 0, %s13
    %p10 = scmp.ge.s32.totalorder %s9, 4
    %s16 = sphi 0, %s28
    %s17 = sphi 0, %s24
    %s18 = sphi 0, %s16
    %s19 = sphi 0, %s17
    %s20 = sphi 0, %s18
    %s21 = sphi 0, %s19
    %s33 = sphi 0, %s35
    %s36 = sphi 0, %s33
    %s37 = sphi 0, %s36
    %s53 = sphi 0, %s37
    %s57 = sphi 0, %s57
    %s59 = sphi 0, %s57
    %s60 = sphi 0, %s59
    %s74 = sphi 0, %s60
    %s78 = sphi 0, %s78
    %s80 = sphi 0, %s78
    %s81 = sphi 0, %s80
    %s95 = sphi 0, %s81
    %s99 = sphi 0, %s99
    %s101 = sphi 0, %s99
    %s102 = sphi 0, %s101
    %s116 = sphi 0, %s102
  $region4: #{tpu_custom_call.1} parent=0 // loop_header_branch
    %12 = sbr.rel (%p10) target = $region8
  $region5: #{tpu_custom_call.1} parent=0 // loop_body
    %s14 = ssub.s32 %s9, 1
    %s15 = ssub.s32 %s9, 2
    %s22 = sadd.s32 1, %s17
    %p23 = scmp.ge.s32.totalorder %s22, 1
    %s24 = scalar_select %p23, 0, %s22
    %s25 = sadd.s32 1, %s16
    %s26 = scalar_select %p23, %s25, %s16
    %p27 = scmp.ge.s32.totalorder %s26, 2
    %s28 = scalar_select %p27, 0, %s26
    %s29 = ssub.s32 %s16, %s28
    %s30 = ssub.s32 %s17, %s24
    %s31 = sor.u32 %s29, %s30
    %p32 = scmp.eq.s32.totalorder %s31, 0
    %s34 = sadd.s32 %s33, 1
    %s35 = scalar_select %p32, %s33, %s34
    %p38 = pneg %p32
    %p39 = scmp.eq.s32.totalorder %s9, 1
    %p40 = por %p38, %p39
    %p41 = scmp.ne.s32.totalorder %s33, %s36
    %p42 = scmp.eq.s32.totalorder %s9, 0
    %p43 = por %p41, %p42
    %p44 = scmp.ne.s32.totalorder %s33, %s36
    %p45 = scmp.eq.s32.totalorder %s14, 1
    %p46 = por %p44, %p45
    %p47 = scmp.ne.s32.totalorder %s36, %s37
    %p48 = scmp.eq.s32.totalorder %s14, 0
    %p49 = por %p47, %p48
    %p50 = scmp.ne.s32.totalorder %s36, %s37
    %p51 = scmp.eq.s32.totalorder %s15, 1
    %p52 = por %p50, %p51
    %p54 = scmp.ne.s32.totalorder %s37, %s53
    %p55 = scmp.eq.s32.totalorder %s15, 0
    %p56 = por %p54, %p55
    %s58 = sadd.s32 %s57, 1
    %p61 = scmp.eq.s32.totalorder %s9, 1
    %p62 = scmp.ne.s32.totalorder %s57, %s59
    %p63 = scmp.eq.s32.totalorder %s9, 0
    %p64 = por %p62, %p63
    %p65 = scmp.ne.s32.totalorder %s57, %s59
    %p66 = scmp.eq.s32.totalorder %s14, 1
    %p67 = por %p65, %p66
    %p68 = scmp.ne.s32.totalorder %s59, %s60
    %p69 = scmp.eq.s32.totalorder %s14, 0
    %p70 = por %p68, %p69
    %p71 = scmp.ne.s32.totalorder %s59, %s60
    %p72 = scmp.eq.s32.totalorder %s15, 1
    %p73 = por %p71, %p72
    %p75 = scmp.ne.s32.totalorder %s60, %s74
    %p76 = scmp.eq.s32.totalorder %s15, 0
    %p77 = por %p75, %p76
    %s79 = sadd.s32 %s78, 1
    %p82 = scmp.eq.s32.totalorder %s9, 1
    %p83 = scmp.ne.s32.totalorder %s78, %s80
    %p84 = scmp.eq.s32.totalorder %s9, 0
    %p85 = por %p83, %p84
    %p86 = scmp.ne.s32.totalorder %s78, %s80
    %p87 = scmp.eq.s32.totalorder %s14, 1
    %p88 = por %p86, %p87
    %p89 = scmp.ne.s32.totalorder %s80, %s81
    %p90 = scmp.eq.s32.totalorder %s14, 0
    %p91 = por %p89, %p90
    %p92 = scmp.ne.s32.totalorder %s80, %s81
    %p93 = scmp.eq.s32.totalorder %s15, 1
    %p94 = por %p92, %p93
    %p96 = scmp.ne.s32.totalorder %s81, %s95
    %p97 = scmp.eq.s32.totalorder %s15, 0
    %p98 = por %p96, %p97
    %s100 = sadd.s32 %s99, 1
    %p103 = scmp.eq.s32.totalorder %s9, 1
    %p104 = scmp.ne.s32.totalorder %s99, %s101
    %p105 = scmp.eq.s32.totalorder %s9, 0
    %p106 = por %p104, %p105
    %p107 = scmp.ne.s32.totalorder %s99, %s101
    %p108 = scmp.eq.s32.totalorder %s14, 1
    %p109 = por %p107, %p108
    %p110 = scmp.ne.s32.totalorder %s101, %s102
    %p111 = scmp.eq.s32.totalorder %s14, 0
    %p112 = por %p110, %p111
    %p113 = scmp.ne.s32.totalorder %s101, %s102
    %p114 = scmp.eq.s32.totalorder %s15, 1
    %p115 = por %p113, %p114
    %p117 = scmp.ne.s32.totalorder %s102, %s116
    %p118 = scmp.eq.s32.totalorder %s15, 0
    %p119 = por %p117, %p118
    %p120 = scmp.le.s32.totalorder 1, %s9
    %p121 = scmp.lt.s32.totalorder %s9, 3
    %p122 = pnand %p120, %p121
    %p123 = pneg %p122
    // Predicated region
    $region9: #{tpu_custom_call.1} parent=5 // pred_check
      _
    $region10: #{tpu_custom_call.1} parent=5 // pred_check_branch
      %125 = sbr.rel (%p122) target = $region12
    $region11: #{tpu_custom_call.1} parent=5 // pred_region
      %s126 = ssub.s32 %s9, 1
      // Predicated region
      $region13: #{tpu_custom_call.1} parent=11 // pred_check
        %p127 = pneg %p70
      $region14: #{tpu_custom_call.1} parent=11 // pred_check_branch
        %129 = sbr.rel (%p127) target = $region16
      $region15: #{tpu_custom_call.1} parent=11 // pred_region
        _
      $region16: #{tpu_custom_call.1} parent=11 // pred_fallthru
        _
      // Predicated region
      $region17: #{tpu_custom_call.1} parent=11 // pred_check
        %p130 = pneg %p91
      $region18: #{tpu_custom_call.1} parent=11 // pred_check_branch
        %132 = sbr.rel (%p130) target = $region20
      $region19: #{tpu_custom_call.1} parent=11 // pred_region
        _
      $region20: #{tpu_custom_call.1} parent=11 // pred_fallthru
        _
    $region12: #{tpu_custom_call.1} parent=5 // pred_fallthru
      _
    %p133 = scmp.lt.s32.totalorder %s9, 2
    // Predicated region
    $region21: #{tpu_custom_call.1} parent=5 // pred_check
      %p134 = pneg %p133
    $region22: #{tpu_custom_call.1} parent=5 // pred_check_branch
      %136 = sbr.rel (%p134) target = $region24
    $region23: #{tpu_custom_call.1} parent=5 // pred_region
      // Predicated region
      $region25: #{tpu_custom_call.1} parent=23 // pred_check
        %p137 = pneg %p43
      $region26: #{tpu_custom_call.1} parent=23 // pred_check_branch
        %139 = sbr.rel (%p137) target = $region28
      $region27: #{tpu_custom_call.1} parent=23 // pred_region
        %s140 = smul.u32 2, %s17
        %p141 = scmp.lt.s32.totalorder %s16, 1
        %s142 = scalar_select %p141, %s16, 1
        %p143 = scmp.lt.s32.totalorder %s140, 1
        %s144 = scalar_select %p143, %s140, 1
        %s145 = smul.addr %s142, 4
        %s146 = sadd.s32 %s144, %s145
        %s147 = smul.addr %s146, 4
        %s148 = scalar_lea.vmem %s0, %s147
        %s149 = smul.u32 2, %s17
      $region28: #{tpu_custom_call.1} parent=23 // pred_fallthru
        _
    $region24: #{tpu_custom_call.1} parent=5 // pred_fallthru
      _
    %p150 = scmp.le.s32.totalorder 1, %s9
    %p151 = scmp.lt.s32.totalorder %s9, 3
    %p152 = pnand %p150, %p151
    %p153 = pneg %p152
    // Predicated region
    $region29: #{tpu_custom_call.1} parent=5 // pred_check
      _
    $region30: #{tpu_custom_call.1} parent=5 // pred_check_branch
      %155 = sbr.rel (%p152) target = $region32
    $region31: #{tpu_custom_call.1} parent=5 // pred_region
      %s156 = ssub.s32 %s9, 1
      %s157 = smul.u32 2, %s19
      %p158 = scmp.lt.s32.totalorder %s18, 1
      %s159 = scalar_select %p158, %s18, 1
      %p160 = scmp.lt.s32.totalorder %s157, 1
      %s161 = scalar_select %p160, %s157, 1
      %s162 = smul.addr %s159, 4
      %s163 = sadd.s32 %s161, %s162
      %s164 = smul.addr %s163, 4
      %s165 = scalar_lea.vmem %s0, %s164
      %p166 = pneg %p49
      %p167 = pneg %p46
      %p168 = pneg %p70
      %p169 = pneg %p67
      %p170 = pneg %p91
      %p171 = pneg %p88
      %p172 = pneg %p112
      %p173 = pneg %p109
      %s174 = smul.u32 2, %s19
      %p175 = scmp.lt.s32.totalorder %s18, 1
      %s176 = scalar_select %p175, %s18, 1
      %p177 = scmp.lt.s32.totalorder %s174, 1
      %s178 = scalar_select %p177, %s174, 1
      %s179 = smul.addr %s176, 4
      %s180 = sadd.s32 %s178, %s179
      %s181 = smul.addr %s180, 4
      %s182 = scalar_lea.vmem %s0, %s181
      %s183 = smul.u32 2, %s19
      %p184 = scmp.eq.s32.totalorder %s18, 0
      %p185 = scmp.eq.s32.totalorder %s19, 0
      %p186 = pnand %p184, %p185
      %p187 = pneg %p186
      %p188 = scmp.eq.s32.totalorder %s18, 1
      %p189 = pnand %p188, %p185
      %p190 = pneg %p189
      // Predicated region
      $region33: #{tpu_custom_call.1} parent=31 // pred_check
        _
      $region34: #{tpu_custom_call.1} parent=31 // pred_check_branch
        %192 = sbr.rel (%p186) target = $region36
      $region35: #{tpu_custom_call.1} parent=31 // pred_region
        %vm193 = vcmask 15360
        %194 = vst.msk [vmem:[%s3] sm:$0xff] %vm193, 0.0
        %195 = vst.msk [vmem:[%s3 + $0x8] sm:$0xff] %vm193, 0.0
      $region36: #{tpu_custom_call.1} parent=31 // pred_fallthru
        _
      %v196 = vld [vmem:[%s182] sm:$0xff]
      %v197 = vld [vmem:[%s182 + $0x8] sm:$0xff]
      %v198 = vunpack.c.l.bf16 %v196
      %v199 = vunpack.c.h.bf16 %v196
      %v200 = vunpack.c.l.bf16 %v197
      %v201 = vunpack.c.h.bf16 %v197
      %v202 = vld [vmem:[%s3] sm:$0xff]
      %v203 = vld [vmem:[%s3 + $0x8] sm:$0xff]
      %v204 = vadd.f32 %v198, %v199
      %205 = vadd.xlane.f32.xlu0 %v204
      %v206 = vpop.xlane.xlu0 %205
      %v207 = vadd.f32 %v200, %v201
      %208 = vadd.xlane.f32.xlu0 %v207
      %v209 = vpop.xlane.xlu0 %208
      %v210 = vadd.f32 %v202, %v206
      %v211 = vadd.f32 %v203, %v209
      %vm212 = vcmask 7168
      %213 = vst.msk [vmem:[%s3] sm:$0xff] %vm212, %v210
      %214 = vst.msk [vmem:[%s3 + $0x8] sm:$0xff] %vm212, %v211
      %v215 = vld [vmem:[%s3] sm:$0xff]
      %v216 = vld [vmem:[%s3 + $0x8] sm:$0xff]
      %v217 = vmul.f32 %v198, %v198
      %v218 = vmul.f32 %v199, %v199
      %v219 = vmul.f32 %v200, %v200
      %v220 = vmul.f32 %v201, %v201
      %v221 = vadd.f32 %v217, %v218
      %222 = vadd.xlane.f32.xlu0 %v221
      %v223 = vpop.xlane.xlu0 %222
      %v224 = vadd.f32 %v219, %v220
      %225 = vadd.xlane.f32.xlu0 %v224
      %v226 = vpop.xlane.xlu0 %225
      %v227 = vadd.f32 %v215, %v223
      %v228 = vadd.f32 %v216, %v226
      %vm229 = vcmask 15368
      %230 = vst.msk [vmem:[%s3] sm:$0xff] %vm229, %v227
      %231 = vst.msk [vmem:[%s3 + $0x8] sm:$0xff] %vm229, %v228
      // Predicated region
      $region37: #{tpu_custom_call.1} parent=31 // pred_check
        _
      $region38: #{tpu_custom_call.1} parent=31 // pred_check_branch
        %233 = sbr.rel (%p189) target = $region40
      $region39: #{tpu_custom_call.1} parent=31 // pred_region
        %v234 = vld [vmem:[%s3] sm:$0xff]
        %v235 = vld [vmem:[%s3 + $0x8] sm:$0xff]
        %v236 = vmul.f32 %v234, 0.001953125
        %v237 = vmul.f32 %v235, 0.001953125
        %v238 = vmul.f32 %v236, %v236
        %v239 = vmul.f32 %v237, %v237
        %242 = vrot.lane.b32.xlu0 %v238, 1
        %v243 = vpop.permute.xlu0 %242
        %244 = vrot.lane.b32.xlu0 %v239, 1
        %v245 = vpop.permute.xlu0 %244
        %v248 = vsub.f32 %v236, %v243
        %v249 = vsub.f32 %v237, %v245
        %v250 = vmax.f32 %v248, 0.0
        %v251 = vmax.f32 %v249, 0.0
        %v252 = vld [vmem:[%s1] sm:$0xff]
        %v253 = vld [vmem:[%s1 + $0x8] sm:$0xff]
        %v254 = vadd.f32 %v250, 1e-05
        %v255 = vadd.f32 %v251, 1e-05
        %v256 = vrsqrt.pop %v254
        %v257 = vrsqrt.pop %v255
        %260 = vrot.lane.b32.xlu0 %v256, 127
        %v261 = vpop.permute.xlu0 %260
        %262 = vrot.lane.b32.xlu0 %v257, 127
        %v263 = vpop.permute.xlu0 %262
        %v266 = vmul.f32 %v252, %v261
        %v267 = vmul.f32 %v253, %v263
        %v268 = vld [vmem:[%s2] sm:$0xff]
        %v269 = vld [vmem:[%s2 + $0x8] sm:$0xff]
        %v270 = vmul.f32 %v236, %v266
        %v271 = vmul.f32 %v237, %v267
        %v272 = vsub.f32 %v268, %v270
        %v273 = vsub.f32 %v269, %v271
        %274 = vst.msk [vmem:[%s3] sm:$0xff] %vm212, %v266
        %275 = vst.msk [vmem:[%s3 + $0x8] sm:$0xff] %vm212, %v267
        %278 = vrot.lane.b32.xlu0 %v272, 1
        %v279 = vpop.permute.xlu0 %278
        %280 = vrot.lane.b32.xlu0 %v273, 1
        %v281 = vpop.permute.xlu0 %280
        %284 = vst.msk [vmem:[%s3] sm:$0xff] %vm229, %v279
        %285 = vst.msk [vmem:[%s3 + $0x8] sm:$0xff] %vm229, %v281
      $region40: #{tpu_custom_call.1} parent=31 // pred_fallthru
        _
      // Predicated region
      $region41: #{tpu_custom_call.1} parent=31 // pred_check
        %p286 = pneg %p109
      $region42: #{tpu_custom_call.1} parent=31 // pred_check_branch
        %288 = sbr.rel (%p286) target = $region44
      $region43: #{tpu_custom_call.1} parent=31 // pred_region
        _
      $region44: #{tpu_custom_call.1} parent=31 // pred_fallthru
        _
      // Predicated region
      $region45: #{tpu_custom_call.1} parent=31 // pred_check
        %p289 = pneg %p109
      $region46: #{tpu_custom_call.1} parent=31 // pred_check_branch
        %291 = sbr.rel (%p289) target = $region48
      $region47: #{tpu_custom_call.1} parent=31 // pred_region
        _
      $region48: #{tpu_custom_call.1} parent=31 // pred_fallthru
        _
    $region32: #{tpu_custom_call.1} parent=5 // pred_fallthru
      _
    %p292 = scmp.le.s32.totalorder 2, %s9
    // Predicated region
    $region49: #{tpu_custom_call.1} parent=5 // pred_check
      %p293 = pneg %p292
    $region50: #{tpu_custom_call.1} parent=5 // pred_check_branch
      %295 = sbr.rel (%p293) target = $region52
    $region51: #{tpu_custom_call.1} parent=5 // pred_region
      %s296 = ssub.s32 %s9, 2
    $region52: #{tpu_custom_call.1} parent=5 // pred_fallthru
      _
  $region6: #{tpu_custom_call.1} parent=0 // loop_footer
    %s13 = sadd.s32 1, %s9
  $region7: #{tpu_custom_call.1} parent=0 // loop_footer_branch
    %8 = sbr.rel target = $region3
  $region8: #{tpu_custom_call.1} parent=0 // loop_exit
    _

</llo_original>
